<compile_context>
chip_gen: v7x
topology: tpu7x:2x2x1
jax: 0.10.0
libtpu: 0.0.40
codegen_flags: <defaults>
</compile_context>

<pallas_src>
import jax
import jax.numpy as jnp
import numpy as np
from jax.experimental import pallas as pl
from jax.experimental.pallas import tpu as pltpu

_LANES = 128
_ROW_QUANTUM = 512                       # rows per block rounded to this (covers f32/bf16/int8 packing)
_ELEM_QUANTUM = 8192                     # 1-D fallback block quantum (multiple of 32*128 packing)
_TARGET_TILE_BYTES = 4 * 1024 * 1024     # per-tile; x4 when double-buffered in+out
_VMEM_LIMIT_BYTES = 48 * 1024 * 1024     # headroom under v7x's 64 MiB physical VMEM


def _copy_kernel(x_ref, o_ref):
    # Pure passthrough of the current VMEM tile.
    o_ref[...] = x_ref[...]


def _run_copy(x_in, block_shape, index_map, grid):
    total_bytes = int(x_in.size) * np.dtype(x_in.dtype).itemsize
    return pl.pallas_call(
        _copy_kernel,
        out_shape=jax.ShapeDtypeStruct(x_in.shape, x_in.dtype),
        grid=grid,
        in_specs=[pl.BlockSpec(block_shape, index_map)],
        out_specs=pl.BlockSpec(block_shape, index_map),
        input_output_aliases={0: 0},
        compiler_params=pltpu.CompilerParams(
            dimension_semantics=("parallel",),
            vmem_limit_bytes=_VMEM_LIMIT_BYTES,
        ),
        cost_estimate=pl.CostEstimate(
            flops=0, transcendentals=0, bytes_accessed=2 * total_bytes
        ),
    )(x_in)


def identity(x: jax.Array) -> jax.Array:
    """Pallas implementation of Identity.forward: returns x unchanged."""
    if x.ndim == 0 or x.size == 0:
        # Nothing to tile; Identity is a no-op.
        return x

    total = int(x.size)
    itemsize = np.dtype(x.dtype).itemsize

    if total % _LANES == 0:
        # Lane-dense 2D view: last dim = 128 (full vreg lanes, unmasked stores).
        rows = total // _LANES
        x_in = x.reshape(rows, _LANES)
        bytes_per_row = _LANES * itemsize
        target_rows = max(
            _ROW_QUANTUM,
            (_TARGET_TILE_BYTES // bytes_per_row) // _ROW_QUANTUM * _ROW_QUANTUM,
        )
        # min(): either a packing-aligned block (divisible by native tiling)
        # or the full row extent (always legal); partial edge blocks are masked.
        rows_per_block = int(min(rows, target_rows))
        grid = (pl.cdiv(rows, rows_per_block),)
        y = _run_copy(x_in, (rows_per_block, _LANES), lambda i: (i, 0), grid)
        return y.reshape(x.shape)

    # Fallback: tiled flat 1-D copy. Block is either a packing-aligned chunk
    # (multiple of 8192 elements, hence divisible by 128 lanes) or the full
    # extent for small arrays; trailing partial blocks are edge-masked.
    x_in = x.reshape(total)
    target_elems = max(
        _ELEM_QUANTUM,
        (_TARGET_TILE_BYTES // itemsize) // _ELEM_QUANTUM * _ELEM_QUANTUM,
    )
    elems_per_block = int(min(total, target_elems))
    grid = (pl.cdiv(total, elems_per_block),)
    y = _run_copy(x_in, (elems_per_block,), lambda i: (i,), grid)
    return y.reshape(x.shape)


if __name__ == "__main__":
    key = jax.random.PRNGKey(0)
    x = jax.random.normal(key, (2, 4, 16, 16), dtype=jnp.float32)  # NCHW

    y = identity(x)
    jax.block_until_ready(y)

    assert y.shape == x.shape and y.dtype == x.dtype
    assert bool(jnp.all(y == x))
    print("KERNEL_OK")
</pallas_src>

<mosaic_0001>
module attributes {stable_mosaic.version = 11 : i64} {
  func.func @_copy_kernel(%arg0: i32, %arg1: memref<16x128xf32, #tpu.memory_space<vmem>>, %arg2: memref<16x128xf32, #tpu.memory_space<vmem>>) attributes {dimension_semantics = [#tpu.dimension_semantics<parallel>], iteration_bounds = array<i64: 1>, scalar_prefetch = 0 : i64, scratch_operands = 0 : i64, tpu.core_type = #tpu.core_type<tc>, window_params = [{transform_indices = @transform_0, window_bounds = array<i64: 16, 128>}, {transform_indices = @transform_1, window_bounds = array<i64: 16, 128>}]} {
    %c0 = arith.constant 0 : index
    %c0_0 = arith.constant 0 : index
    %0 = vector.load %arg1[%c0, %c0_0] : memref<16x128xf32, #tpu.memory_space<vmem>>, vector<16x128xf32>
    %c0_1 = arith.constant 0 : index
    %c0_2 = arith.constant 0 : index
    %1 = vector.load %arg2[%c0_1, %c0_2] : memref<16x128xf32, #tpu.memory_space<vmem>>, vector<16x128xf32>
    tpu.vector_store %arg2[%c0_1, %c0_2], %0 {strides = array<i32>} : memref<16x128xf32, #tpu.memory_space<vmem>>, vector<16x128xf32>,
    return
  }
  func.func @transform_0(%arg0: i32) -> (i32, i32) {
    %c0_i32 = arith.constant 0 : i32
    %c0_i32_0 = arith.constant 0 : i32
    return %arg0, %c0_i32 : i32, i32
  }
  func.func @transform_1(%arg0: i32) -> (i32, i32) {
    %c0_i32 = arith.constant 0 : i32
    %c0_i32_0 = arith.constant 0 : i32
    return %arg0, %c0_i32 : i32, i32
  }
}

</mosaic_0001>

<llo_original>
// kernel: tpu_custom_call.1
$region0: #{tpu_custom_call.1}
  #allocation0 [shape = 'u32[]', space=smem, size = 0x4, offset = 0x4, fixed_abs, tag = 'smem constant byte address 0x4 - core index']
  #allocation1 [shape = 'u32[144,128]{1,0:T(1,128)}', space=vmem, size = 0x12000, scoped, tag = 'internal scratch']
  %s0 = inlined_call_operand.hbm [shape: f32[16,128], index: 0, kind: input, shape index: {}, may-alias: {0,1}]
  %s1 = inlined_call_operand.hbm [shape: f32[16,128], index: 1, kind: output, shape index: {}, may-alias: {0,1}]
  %s2 = sld [smem:[#allocation0]]
  $region18: #{tpu_custom_call.1} parent=0
    _
  %s4 = ssub.s32 1, %s2
  %s5 = scalar_select 0, %s4, %s2
  $region1: #{tpu_custom_call.1} parent=0
    #allocation2 [shape = 'u8[8192]{0}', space=vmem, size = 0x2000, scoped, tag = 'input window, operand 0, single buffered']
    #allocation3 [shape = 's32[1]{0}', space=sflag, size = 0x4, scoped, tag = 'scoped memory for tpu_custom_call.1']
    #allocation4 [shape = 's32[1]{0}', space=sflag, size = 0x4, scoped, tag = 'scoped memory for tpu_custom_call.1']
    #allocation5 [shape = 'u8[8192]{0}', space=vmem, size = 0x2000, scoped, tag = 'output window, operand 0, single buffered']
    %6 = vsyncpa [#allocation3], 0
    %7 = vsyncpa [#allocation4], 0
    // Predicated region
    $region2: #{tpu_custom_call.1} parent=1 // pred_check
      _
    $region3: #{tpu_custom_call.1} parent=1 // pred_check_branch
      %9 = sbr.rel (0) target = $region5
    $region4: #{tpu_custom_call.1} parent=1 // pred_region
      %s11 = ssub.s32 256, 256
      %12 = vsyncadd [#allocation3], %s11
      %s13 = sshll.u32 [#allocation2], 4
      %s14 = int_to_ptr.vmem [resolvable:$true] %s13
      %19 = dma.hbm_to_vmem [thread:$0]  %s0, 256, %s14, [#allocation3], 128, 128, 8
    $region5: #{tpu_custom_call.1} parent=1 // pred_fallthru
      _
    // Predicated region
    $region6: #{tpu_custom_call.1} parent=1 // pred_check
      _
    $region7: #{tpu_custom_call.1} parent=1 // pred_check_branch
      %21 = sbr.rel (0) target = $region9
    $region8: #{tpu_custom_call.1} parent=1 // pred_region
      %22 = dma.done [#allocation3], 256
    $region9: #{tpu_custom_call.1} parent=1 // pred_fallthru
      _
    %v23 = vld [vmem:[#allocation2] sm:$0xff]
    %v24 = vld [vmem:[#allocation2 + $0x8] sm:$0xff]
    %25 = vst [vmem:[#allocation5] sm:$0xff] %v23
    %26 = vst [vmem:[#allocation5 + $0x8] sm:$0xff] %v24
    // Predicated region
    $region10: #{tpu_custom_call.1} parent=1 // pred_check
      _
    $region11: #{tpu_custom_call.1} parent=1 // pred_check_branch
      %28 = sbr.rel (0) target = $region13
    $region12: #{tpu_custom_call.1} parent=1 // pred_region
      %s30 = ssub.s32 256, 256
      %31 = vsyncadd [#allocation4], %s30
      %s32 = sshll.u32 [#allocation5], 4
      %s33 = int_to_ptr.vmem [resolvable:$true] %s32
      %38 = dma.vmem_to_hbm [thread:$0]  %s33, 256, %s1, [#allocation4], 128, 128, 8
    $region13: #{tpu_custom_call.1} parent=1 // pred_fallthru
      _
    // Predicated region
    $region14: #{tpu_custom_call.1} parent=1 // pred_check
      _
    $region15: #{tpu_custom_call.1} parent=1 // pred_check_branch
      %40 = sbr.rel (0) target = $region17
    $region16: #{tpu_custom_call.1} parent=1 // pred_region
      %41 = dma.done [#allocation4], 256
    $region17: #{tpu_custom_call.1} parent=1 // pred_fallthru
      _
    %42 = vsyncpa [#allocation3], 1
    %43 = vsyncpa [#allocation4], 1

</llo_original>
